<compile_context>
chip_gen: v7x
topology: tpu7x:2x2x1
jax: 0.10.0
libtpu: 0.0.40
codegen_flags: <defaults>
</compile_context>

<pallas_src>
import functools

import jax
import jax.numpy as jnp
from jax.experimental import pallas as pl
from jax.experimental.pallas import tpu as pltpu

_LANE = 128


def _round_up(x, m):
    return ((x + m - 1) // m) * m


def _sublane_multiple(dtype):
    # Rows per packed vreg: f32 -> 8, bf16 -> 16, int8/fp8 -> 32.
    return 8 * max(1, 4 // jnp.dtype(dtype).itemsize)


def _vmem_capacity_bytes():
    try:
        cap = int(pltpu.get_tpu_info().vmem_capacity_bytes)
        if cap > 0:
            return cap
    except Exception:
        pass
    return 64 * 1024 * 1024  # conservative (v7x-sized) default


def _const_block_spec(shape):
    # Constant index_map (weights / biases): single-buffer to halve VMEM use.
    try:
        return pl.BlockSpec(shape, lambda i: (0, 0), pipeline_mode=pl.Buffered(1))
    except TypeError:  # older BlockSpec signature without pipeline_mode
        return pl.BlockSpec(shape, lambda i: (0, 0))


def _mlp_kernel(x_ref, w1_ref, b1_ref, w2_ref, b2_ref, w3_ref, b3_ref, o_ref):
    # Three MXU matmuls with f32 accumulation; bias + ReLU on the VPU in f32;
    # activations cast back to the compute dtype between layers so the MXU
    # stays on its bf16-native path. Output stored once in the final dtype.
    x = x_ref[...]
    cdt = x.dtype
    h = jnp.dot(x, w1_ref[...], preferred_element_type=jnp.float32) + b1_ref[...]
    h = jnp.maximum(h, 0.0).astype(cdt)
    h = jnp.dot(h, w2_ref[...], preferred_element_type=jnp.float32) + b2_ref[...]
    h = jnp.maximum(h, 0.0).astype(cdt)
    out = jnp.dot(h, w3_ref[...], preferred_element_type=jnp.float32) + b3_ref[...]
    o_ref[...] = out.astype(o_ref.dtype)


def prepare_params(w1, b1, w2, b2, w3, b3, compute_dtype=jnp.bfloat16):
    """Pad (with zeros) + cast parameters ONCE, off the per-call hot path."""
    F_in, H = w1.shape
    E = w3.shape[1]

    def feat_pad(n):
        # 256-alignment only when the extra padded FLOPs are negligible.
        return _round_up(n, 256 if n >= 1024 else _LANE)

    Fp, Hp, Ep = feat_pad(F_in), feat_pad(H), feat_pad(E)

    def pad2(a, rows, cols, dtype):
        return jnp.pad(a, ((0, rows - a.shape[0]), (0, cols - a.shape[1]))).astype(dtype)

    w1p = pad2(w1, Fp, Hp, compute_dtype)
    w2p = pad2(w2, Hp, Hp, compute_dtype)
    w3p = pad2(w3, Hp, Ep, compute_dtype)
    b1p = pad2(b1.reshape(1, -1), 1, Hp, jnp.float32)
    b2p = pad2(b2.reshape(1, -1), 1, Hp, jnp.float32)
    b3p = pad2(b3.reshape(1, -1), 1, Ep, jnp.float32)
    return (w1p, b1p, w2p, b2p, w3p, b3p)


@functools.partial(jax.jit, static_argnames=("n_embeddings", "block_b"))
def model_attributes_forward(x, w1p, b1p, w2p, b2p, w3p, b3p, *,
                             n_embeddings, block_b=None):
    B, F_in = x.shape
    Fp, Hp = w1p.shape
    Ep = w3p.shape[1]
    compute_dtype = w1p.dtype
    out_dtype = x.dtype
    cbytes = jnp.dtype(compute_dtype).itemsize
    obytes = jnp.dtype(out_dtype).itemsize

    weight_bytes = (Fp * Hp + Hp * Hp + Hp * Ep) * cbytes + (2 * Hp + Ep) * 4
    vmem_cap = _vmem_capacity_bytes()
    # TODO(synk): add an Hp-tiled fallback (reduction grid axis + f32 VMEM
    # accumulator) for when the resident-weight set outgrows the per-core VMEM
    # budget (tightest on v7x's 64 MiB).

    # --- batch tiling ---------------------------------------------------------
    sub = _sublane_multiple(compute_dtype)
    if block_b is None:
        # Weights are fetched once (constant index_map, single-buffered), so the
        # per-step cost is just the x/out DMAs + ~0.35us overhead: use big tiles.
        target = 512 if weight_bytes <= 8 * 1024 * 1024 else 256
        # No forced small-batch split (pure overhead on single-TC v5e/v6e);
        # big batches still shard across the "parallel" grid axis on v7x.
        block_b = min(_round_up(B, sub), target)
    block_b = _round_up(block_b, sub)
    grid_b = pl.cdiv(B, block_b)
    Bp = grid_b * block_b

    x_p = jnp.pad(x, ((0, Bp - B), (0, Fp - F_in))).astype(compute_dtype)

    # --- VMEM budget / scheduler cost hint ------------------------------------
    vmem_need = (
        2 * block_b * Fp * cbytes      # double-buffered input tile
        + 2 * block_b * Ep * obytes    # double-buffered output tile
        + weight_bytes                 # single-buffered resident weights + biases
        + (2 << 20)                    # headroom for Mosaic internal scratch
    )
    vmem_limit = int(min(max(vmem_need, 32 * 1024 * 1024), int(vmem_cap * 0.85)))

    cost = pl.CostEstimate(
        flops=2 * Bp * (Fp * Hp + Hp * Hp + Hp * Ep),
        transcendentals=0,
        bytes_accessed=Bp * Fp * cbytes + weight_bytes + Bp * Ep * obytes,
    )

    out_padded = pl.pallas_call(
        _mlp_kernel,
        out_shape=jax.ShapeDtypeStruct((Bp, Ep), out_dtype),
        grid_spec=pltpu.PrefetchScalarGridSpec(
            num_scalar_prefetch=0,
            grid=(grid_b,),
            in_specs=[
                pl.BlockSpec((block_b, Fp), lambda i: (i, 0)),  # batch tile of x
                _const_block_spec((Fp, Hp)),                    # W1 (resident)
                _const_block_spec((1, Hp)),                     # b1
                _const_block_spec((Hp, Hp)),                    # W2
                _const_block_spec((1, Hp)),                     # b2
                _const_block_spec((Hp, Ep)),                    # W3
                _const_block_spec((1, Ep)),                     # b3
            ],
            out_specs=pl.BlockSpec((block_b, Ep), lambda i: (i, 0)),
        ),
        compiler_params=pltpu.CompilerParams(
            dimension_semantics=("parallel",),
            vmem_limit_bytes=vmem_limit,
        ),
        cost_estimate=cost,
    )(x_p, w1p, b1p, w2p, b2p, w3p, b3p)

    # Strip batch / embedding padding added for lane density.
    return out_padded[:B, :n_embeddings]


def init_params(key, n_features_in, n_features_hidden, n_embeddings, dtype=jnp.float32):
    """PyTorch-Linear-style init: uniform(-1/sqrt(fan_in), +1/sqrt(fan_in))."""
    ks = jax.random.split(key, 6)

    def lin(kw, kb, fan_in, fan_out):
        bound = 1.0 / jnp.sqrt(fan_in)
        w = jax.random.uniform(kw, (fan_in, fan_out), dtype, -bound, bound)
        b = jax.random.uniform(kb, (1, fan_out), dtype, -bound, bound)
        return w, b

    w1, b1 = lin(ks[0], ks[1], n_features_in, n_features_hidden)
    w2, b2 = lin(ks[2], ks[3], n_features_hidden, n_features_hidden)
    w3, b3 = lin(ks[4], ks[5], n_features_hidden, n_embeddings)
    return w1, b1, w2, b2, w3, b3


def reference_forward(x, w1, b1, w2, b2, w3, b3):
    h1 = jnp.maximum(x @ w1 + b1, 0.0)
    h2 = jnp.maximum(h1 @ w2 + b2, 0.0)
    return h2 @ w3 + b3


if __name__ == "__main__":
    # Small shapes consistent with the module: x is (batch, n_features_in).
    n_features_in = 32
    n_features_hidden = 64
    n_embeddings = 16
    batch = 16

    key = jax.random.PRNGKey(0)
    k_x, k_p = jax.random.split(key)
    x = jax.random.normal(k_x, (batch, n_features_in), dtype=jnp.float32)
    params = init_params(k_p, n_features_in, n_features_hidden, n_embeddings)

    ref = reference_forward(x, *params)

    # Exact-semantics check: f32 compute path.
    p_f32 = prepare_params(*params, compute_dtype=jnp.float32)
    out_f32 = jax.block_until_ready(
        model_attributes_forward(x, *p_f32, n_embeddings=n_embeddings))
    assert out_f32.shape == (batch, n_embeddings)
    assert jnp.allclose(out_f32, ref, atol=1e-4, rtol=1e-4), "f32 mismatch vs reference"

    # Default perf path: bf16 on the MXU with f32 accumulation (looser tolerance).
    p_bf16 = prepare_params(*params, compute_dtype=jnp.bfloat16)
    out_bf16 = jax.block_until_ready(
        model_attributes_forward(x, *p_bf16, n_embeddings=n_embeddings))
    assert out_bf16.shape == (batch, n_embeddings)
    assert jnp.allclose(out_bf16.astype(jnp.float32), ref, atol=5e-2, rtol=5e-2), \
        "bf16 mismatch vs reference"

    print("KERNEL_OK")
</pallas_src>

<mosaic_0001>
module attributes {stable_mosaic.version = 11 : i64} {
  func.func @_mlp_kernel(%arg0: i32, %arg1: memref<16x128xf32, #tpu.memory_space<vmem>>, %arg2: memref<128x128xf32, #tpu.memory_space<vmem>>, %arg3: memref<1x128xf32, #tpu.memory_space<vmem>>, %arg4: memref<128x128xf32, #tpu.memory_space<vmem>>, %arg5: memref<1x128xf32, #tpu.memory_space<vmem>>, %arg6: memref<128x128xf32, #tpu.memory_space<vmem>>, %arg7: memref<1x128xf32, #tpu.memory_space<vmem>>, %arg8: memref<16x128xf32, #tpu.memory_space<vmem>>) attributes {dimension_semantics = [#tpu.dimension_semantics<parallel>], iteration_bounds = array<i64: 1>, scalar_prefetch = 0 : i64, scratch_operands = 0 : i64, tpu.core_type = #tpu.core_type<tc>, window_params = [{transform_indices = @transform_0, window_bounds = array<i64: 16, 128>}, {pipeline_mode = #tpu.pipeline_mode<synchronous>, transform_indices = @transform_1, window_bounds = array<i64: 128, 128>}, {pipeline_mode = #tpu.pipeline_mode<synchronous>, transform_indices = @transform_2, window_bounds = array<i64: 1, 128>}, {pipeline_mode = #tpu.pipeline_mode<synchronous>, transform_indices = @transform_3, window_bounds = array<i64: 128, 128>}, {pipeline_mode = #tpu.pipeline_mode<synchronous>, transform_indices = @transform_4, window_bounds = array<i64: 1, 128>}, {pipeline_mode = #tpu.pipeline_mode<synchronous>, transform_indices = @transform_5, window_bounds = array<i64: 128, 128>}, {pipeline_mode = #tpu.pipeline_mode<synchronous>, transform_indices = @transform_6, window_bounds = array<i64: 1, 128>}, {transform_indices = @transform_7, window_bounds = array<i64: 16, 128>}]} {
    %c0 = arith.constant 0 : index
    %c0_0 = arith.constant 0 : index
    %0 = vector.load %arg1[%c0, %c0_0] : memref<16x128xf32, #tpu.memory_space<vmem>>, vector<16x128xf32>
    %c0_1 = arith.constant 0 : index
    %c0_2 = arith.constant 0 : index
    %1 = vector.load %arg2[%c0_1, %c0_2] : memref<128x128xf32, #tpu.memory_space<vmem>>, vector<128x128xf32>
    %cst = arith.constant dense<0.000000e+00> : vector<16x128xf32>
    %2 = tpu.matmul %0, %1, %cst {dimension_numbers = #tpu.dot_dimension_numbers<[1], [0], [0], [1], [0, 0, 1, 1], [], []>} : vector<16x128xf32>, vector<128x128xf32>, vector<16x128xf32> -> vector<16x128xf32>
    %c0_3 = arith.constant 0 : index
    %c0_4 = arith.constant 0 : index
    %3 = vector.load %arg3[%c0_3, %c0_4] : memref<1x128xf32, #tpu.memory_space<vmem>>, vector<1x128xf32>
    %4 = vector.broadcast %3 : vector<1x128xf32> to vector<16x128xf32>
    %5 = arith.addf %2, %4 : vector<16x128xf32>
    %cst_5 = arith.constant 0.000000e+00 : f32
    %6 = vector.broadcast %cst_5 : f32 to vector<16x128xf32>
    %7 = arith.maximumf %5, %6 : vector<16x128xf32>
    %c0_6 = arith.constant 0 : index
    %c0_7 = arith.constant 0 : index
    %8 = vector.load %arg4[%c0_6, %c0_7] : memref<128x128xf32, #tpu.memory_space<vmem>>, vector<128x128xf32>
    %cst_8 = arith.constant dense<0.000000e+00> : vector<16x128xf32>
    %9 = tpu.matmul %7, %8, %cst_8 {dimension_numbers = #tpu.dot_dimension_numbers<[1], [0], [0], [1], [0, 0, 1, 1], [], []>} : vector<16x128xf32>, vector<128x128xf32>, vector<16x128xf32> -> vector<16x128xf32>
    %c0_9 = arith.constant 0 : index
    %c0_10 = arith.constant 0 : index
    %10 = vector.load %arg5[%c0_9, %c0_10] : memref<1x128xf32, #tpu.memory_space<vmem>>, vector<1x128xf32>
    %11 = vector.broadcast %10 : vector<1x128xf32> to vector<16x128xf32>
    %12 = arith.addf %9, %11 : vector<16x128xf32>
    %cst_11 = arith.constant 0.000000e+00 : f32
    %13 = vector.broadcast %cst_11 : f32 to vector<16x128xf32>
    %14 = arith.maximumf %12, %13 : vector<16x128xf32>
    %c0_12 = arith.constant 0 : index
    %c0_13 = arith.constant 0 : index
    %15 = vector.load %arg6[%c0_12, %c0_13] : memref<128x128xf32, #tpu.memory_space<vmem>>, vector<128x128xf32>
    %cst_14 = arith.constant dense<0.000000e+00> : vector<16x128xf32>
    %16 = tpu.matmul %14, %15, %cst_14 {dimension_numbers = #tpu.dot_dimension_numbers<[1], [0], [0], [1], [0, 0, 1, 1], [], []>} : vector<16x128xf32>, vector<128x128xf32>, vector<16x128xf32> -> vector<16x128xf32>
    %c0_15 = arith.constant 0 : index
    %c0_16 = arith.constant 0 : index
    %17 = vector.load %arg7[%c0_15, %c0_16] : memref<1x128xf32, #tpu.memory_space<vmem>>, vector<1x128xf32>
    %18 = vector.broadcast %17 : vector<1x128xf32> to vector<16x128xf32>
    %19 = arith.addf %16, %18 : vector<16x128xf32>
    %c0_17 = arith.constant 0 : index
    %c0_18 = arith.constant 0 : index
    %20 = vector.load %arg8[%c0_17, %c0_18] : memref<16x128xf32, #tpu.memory_space<vmem>>, vector<16x128xf32>
    tpu.vector_store %arg8[%c0_17, %c0_18], %19 {strides = array<i32>} : memref<16x128xf32, #tpu.memory_space<vmem>>, vector<16x128xf32>,
    return
  }
  func.func @transform_0(%arg0: i32) -> (i32, i32) {
    %c0_i32 = arith.constant 0 : i32
    %c0_i32_0 = arith.constant 0 : i32
    return %arg0, %c0_i32 : i32, i32
  }
  func.func @transform_1(%arg0: i32) -> (i32, i32) {
    %c0_i32 = arith.constant 0 : i32
    %c0_i32_0 = arith.constant 0 : i32
    %c0_i32_1 = arith.constant 0 : i32
    return %c0_i32, %c0_i32_0 : i32, i32
  }
  func.func @transform_2(%arg0: i32) -> (i32, i32) {
    %c0_i32 = arith.constant 0 : i32
    %c0_i32_0 = arith.constant 0 : i32
    %c0_i32_1 = arith.constant 0 : i32
    return %c0_i32, %c0_i32_0 : i32, i32
  }
  func.func @transform_3(%arg0: i32) -> (i32, i32) {
    %c0_i32 = arith.constant 0 : i32
    %c0_i32_0 = arith.constant 0 : i32
    %c0_i32_1 = arith.constant 0 : i32
    return %c0_i32, %c0_i32_0 : i32, i32
  }
  func.func @transform_4(%arg0: i32) -> (i32, i32) {
    %c0_i32 = arith.constant 0 : i32
    %c0_i32_0 = arith.constant 0 : i32
    %c0_i32_1 = arith.constant 0 : i32
    return %c0_i32, %c0_i32_0 : i32, i32
  }
  func.func @transform_5(%arg0: i32) -> (i32, i32) {
    %c0_i32 = arith.constant 0 : i32
    %c0_i32_0 = arith.constant 0 : i32
    %c0_i32_1 = arith.constant 0 : i32
    return %c0_i32, %c0_i32_0 : i32, i32
  }
  func.func @transform_6(%arg0: i32) -> (i32, i32) {
    %c0_i32 = arith.constant 0 : i32
    %c0_i32_0 = arith.constant 0 : i32
    %c0_i32_1 = arith.constant 0 : i32
    return %c0_i32, %c0_i32_0 : i32, i32
  }
  func.func @transform_7(%arg0: i32) -> (i32, i32) {
    %c0_i32 = arith.constant 0 : i32
    %c0_i32_0 = arith.constant 0 : i32
    return %arg0, %c0_i32 : i32, i32
  }
}

</mosaic_0001>

<llo_original>
// kernel: model_attributes_forward.1
$region0: #{model_attributes_forward.1}
  #allocation0 [shape = 'u32[]', space=smem, size = 0x4, offset = 0x4, fixed_abs, tag = 'smem constant byte address 0x4 - core index']
  #allocation1 [shape = 'u32[144,128]{1,0:T(1,128)}', space=vmem, size = 0x12000, scoped, tag = 'internal scratch']
  %s0 = inlined_call_operand.vmem [shape: f32[16,128], index: 0, kind: input, shape index: {}]
  %s1 = inlined_call_operand.hbm [shape: f32[128,128], index: 1, kind: input, shape index: {}]
  %s2 = inlined_call_operand.vmem [shape: f32[1,128], index: 2, kind: input, shape index: {}]
  %s3 = inlined_call_operand.hbm [shape: f32[128,128], index: 3, kind: input, shape index: {}]
  %s4 = inlined_call_operand.vmem [shape: f32[1,128], index: 4, kind: input, shape index: {}]
  %s5 = inlined_call_operand.hbm [shape: f32[128,128], index: 5, kind: input, shape index: {}]
  %s6 = inlined_call_operand.vmem [shape: f32[1,128], index: 6, kind: input, shape index: {}]
  %s7 = inlined_call_operand.hbm [shape: f32[16,128], index: 7, kind: output, shape index: {}]
  %s8 = sld [smem:[#allocation0]]
  $region50: #{model_attributes_forward.1} parent=0
    _
  %s10 = ssub.s32 1, %s8
  %s11 = scalar_select 0, %s10, %s8
  $region1: #{model_attributes_forward.1} parent=0
    #allocation2 [shape = 'u8[65536]{0}', space=vmem, size = 0x10000, scoped, tag = 'input window, operand 1, single buffered']
    #allocation3 [shape = 's32[1]{0}', space=sflag, size = 0x4, scoped, tag = 'scoped memory for model_attributes_forward.1']
    #allocation4 [shape = 's32[1]{0}', space=sflag, size = 0x4, scoped, tag = 'scoped memory for model_attributes_forward.1']
    #allocation5 [shape = 'u8[65536]{0}', space=vmem, size = 0x10000, scoped, tag = 'input window, operand 3, single buffered']
    #allocation6 [shape = 's32[1]{0}', space=sflag, size = 0x4, scoped, tag = 'scoped memory for model_attributes_forward.1']
    #allocation7 [shape = 'u8[65536]{0}', space=vmem, size = 0x10000, scoped, tag = 'input window, operand 5, single buffered']
    #allocation8 [shape = 'u8[8192]{0}', space=vmem, size = 0x2000, scoped, tag = 'output window, operand 0, single buffered']
    %12 = vsyncpa [#allocation3], 0
    %13 = vsyncpa [#allocation6], 0
    %14 = vsyncpa [#allocation4], 0
    // Predicated region
    $region2: #{model_attributes_forward.1} parent=1 // pred_check
      _
    $region3: #{model_attributes_forward.1} parent=1 // pred_check_branch
      %16 = sbr.rel (0) target = $region5
    $region4: #{model_attributes_forward.1} parent=1 // pred_region
      _
    $region5: #{model_attributes_forward.1} parent=1 // pred_fallthru
      _
    // Predicated region
    $region6: #{model_attributes_forward.1} parent=1 // pred_check
      _
    $region7: #{model_attributes_forward.1} parent=1 // pred_check_branch
      %18 = sbr.rel (0) target = $region9
    $region8: #{model_attributes_forward.1} parent=1 // pred_region
      %s20 = ssub.s32 2048, 2048
      %21 = vsyncadd [#allocation3], %s20
      %s22 = sshll.u32 [#allocation2], 4
      %s23 = int_to_ptr.vmem [resolvable:$true] %s22
      %28 = dma.hbm_to_vmem [thread:$0]  %s1, 2048, %s23, [#allocation3], 128, 128, 8
    $region9: #{model_attributes_forward.1} parent=1 // pred_fallthru
      _
    // Predicated region
    $region10: #{model_attributes_forward.1} parent=1 // pred_check
      _
    $region11: #{model_attributes_forward.1} parent=1 // pred_check_branch
      %30 = sbr.rel (0) target = $region13
    $region12: #{model_attributes_forward.1} parent=1 // pred_region
      _
    $region13: #{model_attributes_forward.1} parent=1 // pred_fallthru
      _
    // Predicated region
    $region14: #{model_attributes_forward.1} parent=1 // pred_check
      _
    $region15: #{model_attributes_forward.1} parent=1 // pred_check_branch
      %32 = sbr.rel (0) target = $region17
    $region16: #{model_attributes_forward.1} parent=1 // pred_region
      %s34 = ssub.s32 2048, 2048
      %35 = vsyncadd [#allocation6], %s34
      %s36 = sshll.u32 [#allocation5], 4
      %s37 = int_to_ptr.vmem [resolvable:$true] %s36
      %42 = dma.hbm_to_vmem [thread:$0]  %s3, 2048, %s37, [#allocation6], 128, 128, 8
    $region17: #{model_attributes_forward.1} parent=1 // pred_fallthru
      _
    // Predicated region
    $region18: #{model_attributes_forward.1} parent=1 // pred_check
      _
    $region19: #{model_attributes_forward.1} parent=1 // pred_check_branch
      %44 = sbr.rel (0) target = $region21
    $region20: #{model_attributes_forward.1} parent=1 // pred_region
      _
    $region21: #{model_attributes_forward.1} parent=1 // pred_fallthru
      _
    // Predicated region
    $region22: #{model_attributes_forward.1} parent=1 // pred_check
      _
    $region23: #{model_attributes_forward.1} parent=1 // pred_check_branch
      %46 = sbr.rel (0) target = $region25
    $region24: #{model_attributes_forward.1} parent=1 // pred_region
      %s48 = ssub.s32 2048, 2048
      %49 = vsyncadd [#allocation6], %s48
      %s50 = sshll.u32 [#allocation7], 4
      %s51 = int_to_ptr.vmem [resolvable:$true] %s50
      %56 = dma.hbm_to_vmem [thread:$0]  %s5, 2048, %s51, [#allocation6], 128, 128, 8
    $region25: #{model_attributes_forward.1} parent=1 // pred_fallthru
      _
    // Predicated region
    $region26: #{model_attributes_forward.1} parent=1 // pred_check
      _
    $region27: #{model_attributes_forward.1} parent=1 // pred_check_branch
      %58 = sbr.rel (0) target = $region29
    $region28: #{model_attributes_forward.1} parent=1 // pred_region
      _
    $region29: #{model_attributes_forward.1} parent=1 // pred_fallthru
      _
    // Predicated region
    $region30: #{model_attributes_forward.1} parent=1 // pred_check
      _
    $region31: #{model_attributes_forward.1} parent=1 // pred_check_branch
      %60 = sbr.rel (0) target = $region33
    $region32: #{model_attributes_forward.1} parent=1 // pred_region
      %61 = dma.done [#allocation3], 2048
    $region33: #{model_attributes_forward.1} parent=1 // pred_fallthru
      _
    // Predicated region
    $region34: #{model_attributes_forward.1} parent=1 // pred_check
      _
    $region35: #{model_attributes_forward.1} parent=1 // pred_check_branch
      %63 = sbr.rel (0) target = $region37
    $region36: #{model_attributes_forward.1} parent=1 // pred_region
      %64 = dma.done [#allocation6], 2048
    $region37: #{model_attributes_forward.1} parent=1 // pred_fallthru
      _
    // Predicated region
    $region38: #{model_attributes_forward.1} parent=1 // pred_check
      _
    $region39: #{model_attributes_forward.1} parent=1 // pred_check_branch
      %66 = sbr.rel (0) target = $region41
    $region40: #{model_attributes_forward.1} parent=1 // pred_region
      %67 = dma.done [#allocation6], 2048
    $region41: #{model_attributes_forward.1} parent=1 // pred_fallthru
      _
    %v68 = vld [vmem:[%s0] sm:$0xff]
    %v69 = vld [vmem:[%s0 + $0x8] sm:$0xff]
    %v70 = vld [vmem:[#allocation2] sm:$0xff]
    %v71 = vld [vmem:[#allocation2 + $0x8] sm:$0xff]
    %v72 = vld [vmem:[#allocation2 + $0x10] sm:$0xff]
    %v73 = vld [vmem:[#allocation2 + $0x18] sm:$0xff]
    %v74 = vld [vmem:[#allocation2 + $0x20] sm:$0xff]
    %v75 = vld [vmem:[#allocation2 + $0x28] sm:$0xff]
    %v76 = vld [vmem:[#allocation2 + $0x30] sm:$0xff]
    %v77 = vld [vmem:[#allocation2 + $0x38] sm:$0xff]
    %v78 = vld [vmem:[#allocation2 + $0x40] sm:$0xff]
    %v79 = vld [vmem:[#allocation2 + $0x48] sm:$0xff]
    %v80 = vld [vmem:[#allocation2 + $0x50] sm:$0xff]
    %v81 = vld [vmem:[#allocation2 + $0x58] sm:$0xff]
    %v82 = vld [vmem:[#allocation2 + $0x60] sm:$0xff]
    %v83 = vld [vmem:[#allocation2 + $0x68] sm:$0xff]
    %v84 = vld [vmem:[#allocation2 + $0x70] sm:$0xff]
    %v85 = vld [vmem:[#allocation2 + $0x78] sm:$0xff]
    %v86 = vld [vmem:[%s2] sm:$0x1]
    %v88 = vlaneseq
    %v89 = vshrl.u32 %v88, 7
    %v90 = vsub.s32 0, %v89
    %v91 = vrot.slane %v86, %v90
    %93 = vmatprep.subr.mxu0 0.0
    %94 = vmatpush1.msra.mxu0 %v70
    %95 = vmatprep.subr.mxu0 0.0
    %96 = vmatpush1.msra.mxu0 %v71
    %97 = vmatprep.subr.mxu0 0.0
    %98 = vmatpush1.msra.mxu0 %v72
    %99 = vmatprep.subr.mxu0 0.0
    %100 = vmatpush1.msra.mxu0 %v73
    %101 = vmatprep.subr.mxu0 0.0
    %102 = vmatpush1.msra.mxu0 %v74
    %103 = vmatprep.subr.mxu0 0.0
    %104 = vmatpush1.msra.mxu0 %v75
    %105 = vmatprep.subr.mxu0 0.0
    %106 = vmatpush1.msra.mxu0 %v76
    %107 = vmatprep.subr.mxu0 0.0
    %108 = vmatpush1.msra.mxu0 %v77
    %109 = vmatprep.subr.mxu0 0.0
    %110 = vmatpush1.msra.mxu0 %v78
    %111 = vmatprep.subr.mxu0 0.0
    %112 = vmatpush1.msra.mxu0 %v79
    %113 = vmatprep.subr.mxu0 0.0
    %114 = vmatpush1.msra.mxu0 %v80
    %115 = vmatprep.subr.mxu0 0.0
    %116 = vmatpush1.msra.mxu0 %v81
    %117 = vmatprep.subr.mxu0 0.0
    %118 = vmatpush1.msra.mxu0 %v82
    %119 = vmatprep.subr.mxu0 0.0
    %120 = vmatpush1.msra.mxu0 %v83
    %121 = vmatprep.subr.mxu0 0.0
    %122 = vmatpush1.msra.mxu0 %v84
    %123 = vmatprep.subr.mxu0 0.0
    %124 = vmatpush1.msra.mxu0 %v85
    %125 = vmatprep.subr.mxu0 0.0
    %126 = vmatpush1.msra.mxu0 0.0
    %127 = vmatprep.subr.mxu0 0.0
    %128 = vmatpush1.msra.mxu0 0.0
    %129 = vmatprep.subr.mxu0 0.0
    %130 = vmatpush1.msra.mxu0 0.0
    %131 = vmatprep.subr.mxu0 0.0
    %132 = vmatpush1.msra.mxu0 0.0
    %133 = vmatprep.subr.mxu0 0.0
    %134 = vmatpush1.msra.mxu0 0.0
    %135 = vmatprep.subr.mxu0 0.0
    %136 = vmatpush1.msra.mxu0 0.0
    %137 = vmatprep.subr.mxu0 0.0
    %138 = vmatpush1.msra.mxu0 0.0
    %139 = vmatprep.subr.mxu0 0.0
    %140 = vmatpush1.msra.mxu0 0.0
    %141 = vmatprep.subr.mxu0 0.0
    %142 = vmatpush1.msra.mxu0 0.0
    %143 = vmatprep.subr.mxu0 0.0
    %144 = vmatpush1.msra.mxu0 0.0
    %145 = vmatprep.subr.mxu0 0.0
    %146 = vmatpush1.msra.mxu0 0.0
    %147 = vmatprep.subr.mxu0 0.0
    %148 = vmatpush1.msra.mxu0 0.0
    %149 = vmatprep.subr.mxu0 0.0
    %150 = vmatpush1.msra.mxu0 0.0
    %151 = vmatprep.subr.mxu0 0.0
    %152 = vmatpush1.msra.mxu0 0.0
    %153 = vmatprep.subr.mxu0 0.0
    %154 = vmatpush1.msra.mxu0 0.0
    %155 = vmatprep.subr.mxu0 0.0
    %156 = vmatpush1.msra.mxu0 0.0
    %157 = vmatprep.mubr.f32.mxu0 0.0
    %158 = vmatmul.mubr.f32.gmra.mrb[0].mxu0 %v68
    %v159 = vpop.f32.mrb[0].mxu0
    %v160 = vadd.f32 %v91, %v159
    %v161 = vpop.f32.mrb[0].mxu0
    %162 = vmatprep.mubr.f32.mxu0 0.0
    %163 = vmatmul.mubr.f32.gmra.mrb[0].mxu0 %v69
    %v164 = vpop.f32.mrb[0].mxu0
    %v165 = vadd.f32 %v91, %v164
    %v166 = vpop.f32.mrb[0].mxu0
    %167 = vdwg.mxu0
    %v168 = vmax.f32 %v160, 0.0
    %v169 = vmax.f32 %v165, 0.0
    %v170 = vld [vmem:[#allocation5] sm:$0xff]
    %v171 = vld [vmem:[#allocation5 + $0x8] sm:$0xff]
    %v172 = vld [vmem:[#allocation5 + $0x10] sm:$0xff]
    %v173 = vld [vmem:[#allocation5 + $0x18] sm:$0xff]
    %v174 = vld [vmem:[#allocation5 + $0x20] sm:$0xff]
    %v175 = vld [vmem:[#allocation5 + $0x28] sm:$0xff]
    %v176 = vld [vmem:[#allocation5 + $0x30] sm:$0xff]
    %v177 = vld [vmem:[#allocation5 + $0x38] sm:$0xff]
    %v178 = vld [vmem:[#allocation5 + $0x40] sm:$0xff]
    %v179 = vld [vmem:[#allocation5 + $0x48] sm:$0xff]
    %v180 = vld [vmem:[#allocation5 + $0x50] sm:$0xff]
    %v181 = vld [vmem:[#allocation5 + $0x58] sm:$0xff]
    %v182 = vld [vmem:[#allocation5 + $0x60] sm:$0xff]
    %v183 = vld [vmem:[#allocation5 + $0x68] sm:$0xff]
    %v184 = vld [vmem:[#allocation5 + $0x70] sm:$0xff]
    %v185 = vld [vmem:[#allocation5 + $0x78] sm:$0xff]
    %v186 = vld [vmem:[%s4] sm:$0x1]
    %v188 = vlaneseq
    %v189 = vshrl.u32 %v188, 7
    %v190 = vsub.s32 0, %v189
    %v191 = vrot.slane %v186, %v190
    %193 = vmatprep.subr.mxu0 0.0
    %194 = vmatpush1.msra.mxu0 %v170
    %195 = vmatprep.subr.mxu0 0.0
    %196 = vmatpush1.msra.mxu0 %v171
    %197 = vmatprep.subr.mxu0 0.0
    %198 = vmatpush1.msra.mxu0 %v172
    %199 = vmatprep.subr.mxu0 0.0
    %200 = vmatpush1.msra.mxu0 %v173
    %201 = vmatprep.subr.mxu0 0.0
    %202 = vmatpush1.msra.mxu0 %v174
    %203 = vmatprep.subr.mxu0 0.0
    %204 = vmatpush1.msra.mxu0 %v175
    %205 = vmatprep.subr.mxu0 0.0
    %206 = vmatpush1.msra.mxu0 %v176
    %207 = vmatprep.subr.mxu0 0.0
    %208 = vmatpush1.msra.mxu0 %v177
    %209 = vmatprep.subr.mxu0 0.0
    %210 = vmatpush1.msra.mxu0 %v178
    %211 = vmatprep.subr.mxu0 0.0
    %212 = vmatpush1.msra.mxu0 %v179
    %213 = vmatprep.subr.mxu0 0.0
    %214 = vmatpush1.msra.mxu0 %v180
    %215 = vmatprep.subr.mxu0 0.0
    %216 = vmatpush1.msra.mxu0 %v181
    %217 = vmatprep.subr.mxu0 0.0
    %218 = vmatpush1.msra.mxu0 %v182
    %219 = vmatprep.subr.mxu0 0.0
    %220 = vmatpush1.msra.mxu0 %v183
    %221 = vmatprep.subr.mxu0 0.0
    %222 = vmatpush1.msra.mxu0 %v184
    %223 = vmatprep.subr.mxu0 0.0
    %224 = vmatpush1.msra.mxu0 %v185
    %225 = vmatprep.subr.mxu0 0.0
    %226 = vmatpush1.msra.mxu0 0.0
    %227 = vmatprep.subr.mxu0 0.0
    %228 = vmatpush1.msra.mxu0 0.0
    %229 = vmatprep.subr.mxu0 0.0
    %230 = vmatpush1.msra.mxu0 0.0
    %231 = vmatprep.subr.mxu0 0.0
    %232 = vmatpush1.msra.mxu0 0.0
    %233 = vmatprep.subr.mxu0 0.0
    %234 = vmatpush1.msra.mxu0 0.0
    %235 = vmatprep.subr.mxu0 0.0
    %236 = vmatpush1.msra.mxu0 0.0
    %237 = vmatprep.subr.mxu0 0.0
    %238 = vmatpush1.msra.mxu0 0.0
    %239 = vmatprep.subr.mxu0 0.0
    %240 = vmatpush1.msra.mxu0 0.0
    %241 = vmatprep.subr.mxu0 0.0
    %242 = vmatpush1.msra.mxu0 0.0
    %243 = vmatprep.subr.mxu0 0.0
    %244 = vmatpush1.msra.mxu0 0.0
    %245 = vmatprep.subr.mxu0 0.0
    %246 = vmatpush1.msra.mxu0 0.0
    %247 = vmatprep.subr.mxu0 0.0
    %248 = vmatpush1.msra.mxu0 0.0
    %249 = vmatprep.subr.mxu0 0.0
    %250 = vmatpush1.msra.mxu0 0.0
    %251 = vmatprep.subr.mxu0 0.0
    %252 = vmatpush1.msra.mxu0 0.0
    %253 = vmatprep.subr.mxu0 0.0
    %254 = vmatpush1.msra.mxu0 0.0
    %255 = vmatprep.subr.mxu0 0.0
    %256 = vmatpush1.msra.mxu0 0.0
    %257 = vmatprep.mubr.f32.mxu0 0.0
    %258 = vmatmul.mubr.f32.gmra.mrb[0].mxu0 %v168
    %v259 = vpop.f32.mrb[0].mxu0
    %v260 = vadd.f32 %v191, %v259
    %v261 = vpop.f32.mrb[0].mxu0
    %262 = vmatprep.mubr.f32.mxu0 0.0
    %263 = vmatmul.mubr.f32.gmra.mrb[0].mxu0 %v169
    %v264 = vpop.f32.mrb[0].mxu0
    %v265 = vadd.f32 %v191, %v264
    %v266 = vpop.f32.mrb[0].mxu0
    %267 = vdwg.mxu0
    %v268 = vmax.f32 %v260, 0.0
    %v269 = vmax.f32 %v265, 0.0
    %v270 = vld [vmem:[#allocation7] sm:$0xff]
    %v271 = vld [vmem:[#allocation7 + $0x8] sm:$0xff]
    %v272 = vld [vmem:[#allocation7 + $0x10] sm:$0xff]
    %v273 = vld [vmem:[#allocation7 + $0x18] sm:$0xff]
    %v274 = vld [vmem:[#allocation7 + $0x20] sm:$0xff]
    %v275 = vld [vmem:[#allocation7 + $0x28] sm:$0xff]
    %v276 = vld [vmem:[#allocation7 + $0x30] sm:$0xff]
    %v277 = vld [vmem:[#allocation7 + $0x38] sm:$0xff]
    %v278 = vld [vmem:[#allocation7 + $0x40] sm:$0xff]
    %v279 = vld [vmem:[#allocation7 + $0x48] sm:$0xff]
    %v280 = vld [vmem:[#allocation7 + $0x50] sm:$0xff]
    %v281 = vld [vmem:[#allocation7 + $0x58] sm:$0xff]
    %v282 = vld [vmem:[#allocation7 + $0x60] sm:$0xff]
    %v283 = vld [vmem:[#allocation7 + $0x68] sm:$0xff]
    %v284 = vld [vmem:[#allocation7 + $0x70] sm:$0xff]
    %v285 = vld [vmem:[#allocation7 + $0x78] sm:$0xff]
    %v286 = vld [vmem:[%s6] sm:$0x1]
    %v288 = vlaneseq
    %v289 = vshrl.u32 %v288, 7
    %v290 = vsub.s32 0, %v289
    %v291 = vrot.slane %v286, %v290
    %293 = vmatprep.subr.mxu0 0.0
    %294 = vmatpush1.msra.mxu0 %v270
    %295 = vmatprep.subr.mxu0 0.0
    %296 = vmatpush1.msra.mxu0 %v271
    %297 = vmatprep.subr.mxu0 0.0
    %298 = vmatpush1.msra.mxu0 %v272
    %299 = vmatprep.subr.mxu0 0.0
    %300 = vmatpush1.msra.mxu0 %v273
    %301 = vmatprep.subr.mxu0 0.0
    %302 = vmatpush1.msra.mxu0 %v274
    %303 = vmatprep.subr.mxu0 0.0
    %304 = vmatpush1.msra.mxu0 %v275
    %305 = vmatprep.subr.mxu0 0.0
    %306 = vmatpush1.msra.mxu0 %v276
    %307 = vmatprep.subr.mxu0 0.0
    %308 = vmatpush1.msra.mxu0 %v277
    %309 = vmatprep.subr.mxu0 0.0
    %310 = vmatpush1.msra.mxu0 %v278
    %311 = vmatprep.subr.mxu0 0.0
    %312 = vmatpush1.msra.mxu0 %v279
    %313 = vmatprep.subr.mxu0 0.0
    %314 = vmatpush1.msra.mxu0 %v280
    %315 = vmatprep.subr.mxu0 0.0
    %316 = vmatpush1.msra.mxu0 %v281
    %317 = vmatprep.subr.mxu0 0.0
    %318 = vmatpush1.msra.mxu0 %v282
    %319 = vmatprep.subr.mxu0 0.0
    %320 = vmatpush1.msra.mxu0 %v283
    %321 = vmatprep.subr.mxu0 0.0
    %322 = vmatpush1.msra.mxu0 %v284
    %323 = vmatprep.subr.mxu0 0.0
    %324 = vmatpush1.msra.mxu0 %v285
    %325 = vmatprep.subr.mxu0 0.0
    %326 = vmatpush1.msra.mxu0 0.0
    %327 = vmatprep.subr.mxu0 0.0
    %328 = vmatpush1.msra.mxu0 0.0
    %329 = vmatprep.subr.mxu0 0.0
    %330 = vmatpush1.msra.mxu0 0.0
    %331 = vmatprep.subr.mxu0 0.0
    %332 = vmatpush1.msra.mxu0 0.0
    %333 = vmatprep.subr.mxu0 0.0
    %334 = vmatpush1.msra.mxu0 0.0
    %335 = vmatprep.subr.mxu0 0.0
    %336 = vmatpush1.msra.mxu0 0.0
    %337 = vmatprep.subr.mxu0 0.0
    %338 = vmatpush1.msra.mxu0 0.0
    %339 = vmatprep.subr.mxu0 0.0
    %340 = vmatpush1.msra.mxu0 0.0
    %341 = vmatprep.subr.mxu0 0.0
    %342 = vmatpush1.msra.mxu0 0.0
    %343 = vmatprep.subr.mxu0 0.0
    %344 = vmatpush1.msra.mxu0 0.0
    %345 = vmatprep.subr.mxu0 0.0
    %346 = vmatpush1.msra.mxu0 0.0
    %347 = vmatprep.subr.mxu0 0.0
    %348 = vmatpush1.msra.mxu0 0.0
    %349 = vmatprep.subr.mxu0 0.0
    %350 = vmatpush1.msra.mxu0 0.0
    %351 = vmatprep.subr.mxu0 0.0
    %352 = vmatpush1.msra.mxu0 0.0
    %353 = vmatprep.subr.mxu0 0.0
    %354 = vmatpush1.msra.mxu0 0.0
    %355 = vmatprep.subr.mxu0 0.0
    %356 = vmatpush1.msra.mxu0 0.0
    %357 = vmatprep.mubr.f32.mxu0 0.0
    %358 = vmatmul.mubr.f32.gmra.mrb[0].mxu0 %v268
    %v359 = vpop.f32.mrb[0].mxu0
    %v360 = vadd.f32 %v291, %v359
    %v361 = vpop.f32.mrb[0].mxu0
    %362 = vmatprep.mubr.f32.mxu0 0.0
    %363 = vmatmul.mubr.f32.gmra.mrb[0].mxu0 %v269
    %v364 = vpop.f32.mrb[0].mxu0
    %v365 = vadd.f32 %v291, %v364
    %v366 = vpop.f32.mrb[0].mxu0
    %367 = vdwg.mxu0
    %368 = vst [vmem:[#allocation8] sm:$0xff] %v360
    %369 = vst [vmem:[#allocation8 + $0x8] sm:$0xff] %v365
    // Predicated region
    $region42: #{model_attributes_forward.1} parent=1 // pred_check
      _
    $region43: #{model_attributes_forward.1} parent=1 // pred_check_branch
      %371 = sbr.rel (0) target = $region45
    $region44: #{model_attributes_forward.1} parent=1 // pred_region
      %s373 = ssub.s32 256, 256
      %374 = vsyncadd [#allocation4], %s373
      %s375 = sshll.u32 [#allocation8], 4
      %s376 = int_to_ptr.vmem [resolvable:$true] %s375
      %381 = dma.vmem_to_hbm [thread:$0]  %s376, 256, %s7, [#allocation4], 128, 128, 8
    $region45: #{model_attributes_forward.1} parent=1 // pred_fallthru
      _
    // Predicated region
    $region46: #{model_attributes_forward.1} parent=1 // pred_check
      _
    $region47: #{model_attributes_forward.1} parent=1 // pred_check_branch
      %383 = sbr.rel (0) target = $region49
    $region48: #{model_attributes_forward.1} parent=1 // pred_region
      %384 = dma.done [#allocation4], 256
    $region49: #{model_attributes_forward.1} parent=1 // pred_fallthru
      _
    %385 = vsyncpa [#allocation3], 1
    %386 = vsyncpa [#allocation6], 1
    %387 = vsyncpa [#allocation4], 1

</llo_original>
